<compile_context>
chip_gen: v6e
topology: v6e:2x2x1
jax: 0.10.0
libtpu: 0.0.40
codegen_flags: <defaults>
</compile_context>

<pallas_src>
import functools

import jax
import jax.numpy as jnp
from jax.experimental import pallas as pl
from jax.experimental.pallas import tpu as pltpu


def _cdiv(a, b):
    return -(-a // b)


def _upsample_kernel(x_ref, o_ref, *, d, aligned):
    # x_ref: (R, n_x, d)        R token-grid rows of input tokens
    # o_ref: (R, 2, n_x, 2*d)   lane-dense output view:
    #   o[y, r, x, c*d:(c+1)*d] = in[y, x, :]   for r, c in {0, 1}
    x = x_ref[...]
    if aligned:
        # d % 128 == 0: the splice at offset d is lane-aligned, so each of the
        # four stores is a dense unmasked vst; no lane-duplicated intermediate.
        o_ref[:, 0, :, 0:d] = x
        o_ref[:, 0, :, d:] = x
        o_ref[:, 1, :, 0:d] = x
        o_ref[:, 1, :, d:] = x
    else:
        # Unaligned d: one lane-duplicated tile stored twice beats four
        # misaligned partial stores.
        xx = jnp.concatenate([x, x], axis=-1)
        o_ref[:, 0, :, :] = xx
        o_ref[:, 1, :, :] = xx


def _vmem_capacity_bytes(default=64 * 1024 * 1024):
    """Per-TensorCore VMEM capacity; conservative (v7x) fallback."""
    try:
        cap = getattr(pltpu.get_tpu_info(), "vmem_capacity_bytes", None)
        if cap:
            return int(cap)
    except Exception:
        pass
    return default


def _pick_rows_per_step(rows, n_x, d, itemsize, *, target_block_bytes,
                        vmem_budget_bytes, min_steps=8):
    """Token-grid rows per grid step.

    Targets ~target_block_bytes of output per step (streaming copies reach the
    HBM roofline well below the VMEM cap), bounded by a per-chip VMEM budget
    using the 12x peak factor (2x input + 2x 4x output double-buffered), and
    capped so there are >= min_steps grid steps when there is enough work
    (>= 4 steps per TensorCore on v7x).
    """
    out_row_bytes = 4 * n_x * d * itemsize     # one output token-grid row
    peak_row_bytes = 12 * n_x * d * itemsize   # double-buffered in + out
    r = min(rows,
            max(1, target_block_bytes // max(1, out_row_bytes)),
            max(1, vmem_budget_bytes // max(1, peak_row_bytes)))
    r = max(1, min(r, _cdiv(rows, min_steps)))
    return r


def patch_upsample_2d(x, *, target_block_bytes=4 * 1024 * 1024):
    """x: (b, n, d) with n a perfect square -> (b, 4*n, d), nearest 2x."""
    b, n, d = x.shape
    n_y = round(n ** 0.5)
    n_x = n // n_y
    assert n_y * n_x == n, "n must be a perfect square"

    rows = b * n_y
    itemsize = jnp.dtype(x.dtype).itemsize

    vmem_cap = _vmem_capacity_bytes()                         # 64 MiB (v7x) / 128 MiB (v5e/v6e)
    vmem_limit = min((vmem_cap * 5) // 8, 96 * 1024 * 1024)   # ~40 MiB v7x, ~80 MiB v5e/v6e
    vmem_budget = vmem_limit // 2                             # headroom for Pallas scratch

    R = _pick_rows_per_step(rows, n_x, d, itemsize,
                            target_block_bytes=target_block_bytes,
                            vmem_budget_bytes=vmem_budget)
    steps = _cdiv(rows, R)
    # v7x shards the (parallel) grid axis across 2 TensorCores: prefer an even
    # step count so both cores get balanced work (best effort, no looping).
    if steps > 1 and steps % 2 == 1:
        R = max(1, _cdiv(rows, steps + 1))
        steps = _cdiv(rows, R)

    aligned = (d % 128 == 0)
    xg = x.reshape(rows, n_x, d)

    out = pl.pallas_call(
        functools.partial(_upsample_kernel, d=d, aligned=aligned),
        out_shape=jax.ShapeDtypeStruct((rows, 2, n_x, 2 * d), x.dtype),
        grid_spec=pl.GridSpec(
            grid=(steps,),
            in_specs=[pl.BlockSpec((R, n_x, d), lambda i: (i, 0, 0))],
            out_specs=pl.BlockSpec((R, 2, n_x, 2 * d), lambda i: (i, 0, 0, 0)),
        ),
        compiler_params=pltpu.CompilerParams(
            dimension_semantics=("parallel",),
            vmem_limit_bytes=int(vmem_limit),
        ),
    )(xg)

    # Row-major layout of (rows, 2, n_x, 2*d) == (b, n_y, 2, n_x, 2, d), so a
    # contiguous reshape gives the upsampled token sequence directly.
    return out.reshape(b, 4 * n, d)


def _reference_upsample(x):
    b, n, d = x.shape
    n_y = round(n ** 0.5)
    xg = x.reshape(b, n_y, n_y, d)
    up = jnp.repeat(jnp.repeat(xg, 2, axis=1), 2, axis=2)
    return up.reshape(b, 4 * n, d)


if __name__ == "__main__":
    key = jax.random.PRNGKey(0)
    cases = [
        (2, 16, 32),    # unaligned d -> concat path
        (2, 16, 128),   # d % 128 == 0 -> 4-store lane-aligned path
        (3, 9, 128),    # rows = 9 -> cdiv grid with a partial last block
    ]
    for (b, n, d) in cases:
        key, sub = jax.random.split(key)
        x = jax.random.normal(sub, (b, n, d), dtype=jnp.float32)
        y = jax.block_until_ready(patch_upsample_2d(x))
        ref = _reference_upsample(x)
        assert y.shape == ref.shape
        assert y.dtype == x.dtype
        assert jnp.allclose(y, ref), f"mismatch for shape {(b, n, d)}"
    print("KERNEL_OK")
</pallas_src>

<mosaic_0001>
module attributes {stable_mosaic.version = 11 : i64} {
  func.func @_upsample_kernel(%arg0: i32, %arg1: memref<1x4x32xf32, #tpu.memory_space<vmem>>, %arg2: memref<1x2x4x64xf32, #tpu.memory_space<vmem>>) attributes {dimension_semantics = [#tpu.dimension_semantics<parallel>], iteration_bounds = array<i64: 8>, scalar_prefetch = 0 : i64, scratch_operands = 0 : i64, tpu.core_type = #tpu.core_type<tc>, window_params = [{transform_indices = @transform_0, window_bounds = array<i64: 1, 4, 32>}, {transform_indices = @transform_1, window_bounds = array<i64: 1, 2, 4, 64>}]} {
    %c0 = arith.constant 0 : index
    %c0_0 = arith.constant 0 : index
    %c0_1 = arith.constant 0 : index
    %0 = vector.load %arg1[%c0, %c0_0, %c0_1] : memref<1x4x32xf32, #tpu.memory_space<vmem>>, vector<1x4x32xf32>
    %1 = tpu.concatenate %0, %0 in 2 : vector<1x4x32xf32>, vector<1x4x32xf32> -> vector<1x4x64xf32>
    %c0_2 = arith.constant 0 : index
    %c0_3 = arith.constant 0 : index
    %c0_4 = arith.constant 0 : index
    %c0_5 = arith.constant 0 : index
    %2 = vector.load %arg2[%c0_2, %c0_3, %c0_4, %c0_5] : memref<1x2x4x64xf32, #tpu.memory_space<vmem>>, vector<1x1x4x64xf32>
    %3 = vector.shape_cast %2 : vector<1x1x4x64xf32> to vector<1x4x64xf32>
    %4 = vector.shape_cast %1 : vector<1x4x64xf32> to vector<1x1x4x64xf32>
    tpu.vector_store %arg2[%c0_2, %c0_3, %c0_4, %c0_5], %4 {strides = array<i32>} : memref<1x2x4x64xf32, #tpu.memory_space<vmem>>, vector<1x1x4x64xf32>,
    %c0_6 = arith.constant 0 : index
    %c1 = arith.constant 1 : index
    %c0_7 = arith.constant 0 : index
    %c0_8 = arith.constant 0 : index
    %5 = vector.load %arg2[%c0_6, %c1, %c0_7, %c0_8] : memref<1x2x4x64xf32, #tpu.memory_space<vmem>>, vector<1x1x4x64xf32>
    %6 = vector.shape_cast %5 : vector<1x1x4x64xf32> to vector<1x4x64xf32>
    %7 = vector.shape_cast %1 : vector<1x4x64xf32> to vector<1x1x4x64xf32>
    tpu.vector_store %arg2[%c0_6, %c1, %c0_7, %c0_8], %7 {strides = array<i32>} : memref<1x2x4x64xf32, #tpu.memory_space<vmem>>, vector<1x1x4x64xf32>,
    return
  }
  func.func @transform_0(%arg0: i32) -> (i32, i32, i32) {
    %c0_i32 = arith.constant 0 : i32
    %c0_i32_0 = arith.constant 0 : i32
    %c0_i32_1 = arith.constant 0 : i32
    return %arg0, %c0_i32, %c0_i32_0 : i32, i32, i32
  }
  func.func @transform_1(%arg0: i32) -> (i32, i32, i32, i32) {
    %c0_i32 = arith.constant 0 : i32
    %c0_i32_0 = arith.constant 0 : i32
    %c0_i32_1 = arith.constant 0 : i32
    %c0_i32_2 = arith.constant 0 : i32
    return %arg0, %c0_i32, %c0_i32_0, %c0_i32_1 : i32, i32, i32, i32
  }
}

</mosaic_0001>

<llo_original>
// kernel: tpu_custom_call.1
$region0: #{tpu_custom_call.1}
  #allocation0 [shape = 'u32[]', space=smem, size = 0x4, offset = 0x4, fixed_abs, tag = 'smem constant byte address 0x4 - core index']
  #allocation1 [shape = 'u32[144,128]{1,0:T(1,128)}', space=vmem, size = 0x12000, scoped, tag = 'internal scratch']
  %s0 = inlined_call_operand.hbm [shape: f32[8,4,32], index: 0, kind: input, shape index: {}]
  %s1 = inlined_call_operand.hbm [shape: f32[8,2,4,64], index: 1, kind: output, shape index: {}]
  %s2 = sld [smem:[#allocation0]]
  $region41: #{tpu_custom_call.1} parent=0
    _
  %s4 = ssub.s32 1, %s2
  %s5 = scalar_select 0, %s4, %s2
  $region1: #{tpu_custom_call.1} parent=0
    #allocation2 [shape = 'u8[4096]{0}', space=vmem, size = 0x1000, scoped, tag = 'input window, operand 0']
    #allocation3 [shape = 's32[2]{0}', space=sflag, size = 0x8, scoped, tag = 'scoped memory for tpu_custom_call.1']
    #allocation4 [shape = 's32[2]{0}', space=sflag, size = 0x8, scoped, tag = 'scoped memory for tpu_custom_call.1']
    #allocation5 [shape = 'u8[8192]{0}', space=vmem, size = 0x2000, scoped, tag = 'output window, operand 0']
    %6 = vsyncpa [#allocation3], 0
    %s7 = scalar_lea.sflag [#allocation3], 1
    %8 = vsyncpa %s7, 0
    %9 = vsyncpa [#allocation4], 0
    %s10 = scalar_lea.sflag [#allocation4], 1
    %11 = vsyncpa %s10, 0
    loop: start=0, step=1, limit=10
    $region2: #{tpu_custom_call.1} parent=1 // loop_pre_header
      _
    $region3: #{tpu_custom_call.1} parent=1 // loop_header
      %s13 = sphi 0, %s17
      %p14 = scmp.ge.s32.totalorder %s13, 10
      %s23 = sphi 0, %s25
      %s26 = sphi 0, %s23
      %s27 = sphi 0, %s26
      %s43 = sphi 0, %s27
      %s49 = sphi 0, %s51
      %s52 = sphi 0, %s49
      %s53 = sphi 0, %s52
      %s69 = sphi 0, %s53
    $region4: #{tpu_custom_call.1} parent=1 // loop_header_branch
      %16 = sbr.rel (%p14) target = $region8
    $region5: #{tpu_custom_call.1} parent=1 // loop_body
      %s18 = ssub.s32 %s13, 1
      %s19 = ssub.s32 %s13, 2
      %s20 = sadd.s32 %s13, 1
      %s21 = ssub.s32 %s13, %s20
      %p22 = scmp.eq.s32.totalorder %s21, 0
      %s24 = sadd.s32 %s23, 1
      %s25 = scalar_select %p22, %s23, %s24
      %p28 = pneg %p22
      %p29 = scmp.eq.s32.totalorder %s13, 7
      %p30 = por %p28, %p29
      %p31 = scmp.ne.s32.totalorder %s23, %s26
      %p32 = scmp.eq.s32.totalorder %s13, 0
      %p33 = por %p31, %p32
      %p34 = scmp.ne.s32.totalorder %s23, %s26
      %p35 = scmp.eq.s32.totalorder %s18, 7
      %p36 = por %p34, %p35
      %p37 = scmp.ne.s32.totalorder %s26, %s27
      %p38 = scmp.eq.s32.totalorder %s18, 0
      %p39 = por %p37, %p38
      %p40 = scmp.ne.s32.totalorder %s26, %s27
      %p41 = scmp.eq.s32.totalorder %s19, 7
      %p42 = por %p40, %p41
      %p44 = scmp.ne.s32.totalorder %s27, %s43
      %p45 = scmp.eq.s32.totalorder %s19, 0
      %p46 = por %p44, %p45
      %s47 = ssub.s32 %s13, %s20
      %p48 = scmp.eq.s32.totalorder %s47, 0
      %s50 = sadd.s32 %s49, 1
      %s51 = scalar_select %p48, %s49, %s50
      %p54 = pneg %p48
      %p55 = scmp.eq.s32.totalorder %s13, 7
      %p56 = por %p54, %p55
      %p57 = scmp.ne.s32.totalorder %s49, %s52
      %p58 = scmp.eq.s32.totalorder %s13, 0
      %p59 = por %p57, %p58
      %p60 = scmp.ne.s32.totalorder %s49, %s52
      %p61 = scmp.eq.s32.totalorder %s18, 7
      %p62 = por %p60, %p61
      %p63 = scmp.ne.s32.totalorder %s52, %s53
      %p64 = scmp.eq.s32.totalorder %s18, 0
      %p65 = por %p63, %p64
      %p66 = scmp.ne.s32.totalorder %s52, %s53
      %p67 = scmp.eq.s32.totalorder %s19, 7
      %p68 = por %p66, %p67
      %p70 = scmp.ne.s32.totalorder %s53, %s69
      %p71 = scmp.eq.s32.totalorder %s19, 0
      %p72 = por %p70, %p71
      %p73 = scmp.le.s32.totalorder 1, %s13
      %p74 = scmp.lt.s32.totalorder %s13, 9
      %p75 = pnand %p73, %p74
      %p76 = pneg %p75
      // Predicated region
      $region9: #{tpu_custom_call.1} parent=5 // pred_check
        _
      $region10: #{tpu_custom_call.1} parent=5 // pred_check_branch
        %78 = sbr.rel (%p75) target = $region12
      $region11: #{tpu_custom_call.1} parent=5 // pred_region
        %s79 = ssub.s32 %s13, 1
      $region12: #{tpu_custom_call.1} parent=5 // pred_fallthru
        _
      %p80 = scmp.lt.s32.totalorder %s13, 8
      // Predicated region
      $region13: #{tpu_custom_call.1} parent=5 // pred_check
        %p81 = pneg %p80
      $region14: #{tpu_custom_call.1} parent=5 // pred_check_branch
        %83 = sbr.rel (%p81) target = $region16
      $region15: #{tpu_custom_call.1} parent=5 // pred_region
        // Predicated region
        $region17: #{tpu_custom_call.1} parent=15 // pred_check
          %p84 = pneg %p33
        $region18: #{tpu_custom_call.1} parent=15 // pred_check_branch
          %86 = sbr.rel (%p84) target = $region20
        $region19: #{tpu_custom_call.1} parent=15 // pred_region
          %s87 = sand.u32 %s23, 1
          %s88 = scalar_lea.sflag [#allocation3], %s87
          %s89 = sand.u32 %s23, 1
          %s90 = smul.addr %s89, 4
          %s91 = scalar_lea.vmem [#allocation2], %s90
          %s93 = ssub.s32 64, 64
          %94 = vsyncadd %s88, %s93
          %s95 = smul.addr %s13, 64
          %s96 = scalar_lea.hbm %s0, %s95
          %s98 = sshll.u32 %s91, 4
          %s99 = int_to_ptr.vmem [resolvable:$true] %s98
          %101 = dma.hbm_to_vmem [thread:$0]  %s96, 64, %s99, %s88
        $region20: #{tpu_custom_call.1} parent=15 // pred_fallthru
          _
      $region16: #{tpu_custom_call.1} parent=5 // pred_fallthru
        _
      %p102 = scmp.le.s32.totalorder 1, %s13
      %p103 = scmp.lt.s32.totalorder %s13, 9
      %p104 = pnand %p102, %p103
      %p105 = pneg %p104
      // Predicated region
      $region21: #{tpu_custom_call.1} parent=5 // pred_check
        _
      $region22: #{tpu_custom_call.1} parent=5 // pred_check_branch
        %107 = sbr.rel (%p104) target = $region24
      $region23: #{tpu_custom_call.1} parent=5 // pred_region
        %s108 = ssub.s32 %s13, 1
        %s109 = sand.u32 %s26, 1
        %s110 = scalar_lea.sflag [#allocation3], %s109
        %s111 = sand.u32 %s26, 1
        %s112 = smul.addr %s111, 4
        %s113 = scalar_lea.vmem [#allocation2], %s112
        // Predicated region
        $region25: #{tpu_custom_call.1} parent=23 // pred_check
          %p114 = pneg %p39
        $region26: #{tpu_custom_call.1} parent=23 // pred_check_branch
          %116 = sbr.rel (%p114) target = $region28
        $region27: #{tpu_custom_call.1} parent=23 // pred_region
          %117 = dma.done %s110, 64
        $region28: #{tpu_custom_call.1} parent=23 // pred_fallthru
          _
        %s118 = sand.u32 %s26, 1
        %s119 = scalar_lea.sflag [#allocation3], %s118
        %s120 = sand.u32 %s26, 1
        %s121 = smul.addr %s120, 4
        %s122 = scalar_lea.vmem [#allocation2], %s121
        %p123 = pneg %p39
        %p124 = pneg %p36
        %p125 = pneg %p65
        %p126 = pneg %p62
        %s127 = sand.u32 %s52, 1
        %s128 = scalar_lea.sflag [#allocation4], %s127
        %s129 = sand.u32 %s52, 1
        %s130 = smul.addr %s129, 8
        %s131 = scalar_lea.vmem [#allocation5], %s130
        %v132 = vld [vmem:[%s113] sm:$0xf]
        %134 = vrot.lane.b32.xlu0 %v132, 32
        %v135 = vpop.permute.xlu0 %134
        %vm137 = vcmask 261120
        %v138 = vsel %vm137, %v132, %v135
        %vm139 = vcmask 519168
        %140 = vst.msk [vmem:[%s131] sm:$0xf] %vm139, %v138
        %s141 = scalar_lea.vmem %s131, 4 [#allocation5]
        %142 = vst.msk [vmem:[%s141] sm:$0xf] %vm139, %v138
        %s143 = sand.u32 %s52, 1
        %s144 = scalar_lea.sflag [#allocation4], %s143
        %s145 = sand.u32 %s52, 1
        %s146 = smul.addr %s145, 8
        %s147 = scalar_lea.vmem [#allocation5], %s146
        // Predicated region
        $region29: #{tpu_custom_call.1} parent=23 // pred_check
          %p148 = pneg %p62
        $region30: #{tpu_custom_call.1} parent=23 // pred_check_branch
          %150 = sbr.rel (%p148) target = $region32
        $region31: #{tpu_custom_call.1} parent=23 // pred_region
          %s152 = ssub.s32 128, 128
          %153 = vsyncadd %s144, %s152
          %s154 = smul.addr %s18, 2
          %s155 = smul.addr %s154, 64
          %s156 = scalar_lea.hbm %s1, %s155
          %s157 = sshll.u32 %s147, 4
          %s158 = int_to_ptr.vmem [resolvable:$true] %s157
          %163 = dma.vmem_to_hbm [thread:$0]  %s158, 128, %s156, %s144, 64, 64, 4
        $region32: #{tpu_custom_call.1} parent=23 // pred_fallthru
          _
      $region24: #{tpu_custom_call.1} parent=5 // pred_fallthru
        _
      %p164 = scmp.le.s32.totalorder 2, %s13
      // Predicated region
      $region33: #{tpu_custom_call.1} parent=5 // pred_check
        %p165 = pneg %p164
      $region34: #{tpu_custom_call.1} parent=5 // pred_check_branch
        %167 = sbr.rel (%p165) target = $region36
      $region35: #{tpu_custom_call.1} parent=5 // pred_region
        %s168 = ssub.s32 %s13, 2
        // Predicated region
        $region37: #{tpu_custom_call.1} parent=35 // pred_check
          %p169 = pneg %p68
        $region38: #{tpu_custom_call.1} parent=35 // pred_check_branch
          %171 = sbr.rel (%p169) target = $region40
        $region39: #{tpu_custom_call.1} parent=35 // pred_region
          %s172 = sand.u32 %s53, 1
          %s173 = scalar_lea.sflag [#allocation4], %s172
          %s174 = sand.u32 %s53, 1
          %s175 = smul.addr %s174, 8
          %s176 = scalar_lea.vmem [#allocation5], %s175
          %177 = dma.done %s173, 128
        $region40: #{tpu_custom_call.1} parent=35 // pred_fallthru
          _
      $region36: #{tpu_custom_call.1} parent=5 // pred_fallthru
        _
    $region6: #{tpu_custom_call.1} parent=1 // loop_footer
      %s17 = sadd.s32 1, %s13
    $region7: #{tpu_custom_call.1} parent=1 // loop_footer_branch
      %12 = sbr.rel target = $region3
    $region8: #{tpu_custom_call.1} parent=1 // loop_exit
      _
    %178 = vsyncpa [#allocation3], 1
    %s179 = scalar_lea.sflag [#allocation3], 1
    %180 = vsyncpa %s179, 1
    %181 = vsyncpa [#allocation4], 1
    %s182 = scalar_lea.sflag [#allocation4], 1
    %183 = vsyncpa %s182, 1

</llo_original>
